<compile_context>
chip_gen: v6e
topology: v6e:2x2x1
jax: 0.10.0
libtpu: 0.0.40
codegen_flags: <defaults>
</compile_context>

<pallas_src>
import functools

import jax
import jax.numpy as jnp
import numpy as np
from jax.experimental import pallas as pl
from jax.experimental.pallas import tpu as pltpu


def _vmem_limit_bytes():
    """Scoped-VMEM limit: ~75% of physical VMEM, clamped to [32 MiB, 96 MiB]."""
    try:
        info = pltpu.get_tpu_info()
        phys = getattr(info, "vmem_capacity_bytes", None)
        if phys:
            return int(min(96 * 1024 * 1024,
                           max(32 * 1024 * 1024, int(phys) * 3 // 4)))
    except Exception:
        pass
    return 32 * 1024 * 1024


def _mce_kernel(pred_ref, tgt_ref, out_ref, m_ref, l_ref, pk_ref, *,
                c_block, num_classes):
    # pred_ref: (TR, TC) float tile (any dtype; math done in f32)
    # tgt_ref : (TR, 1) int32; -1 = masked / padded row -> contributes 0 loss
    # out_ref : (1, 8, 128) f32 lane-dense partial-sum tile for this row block
    # m/l/pk  : (TR, 1) f32 scratch: running max, running exp-sum, picked logit
    c = pl.program_id(1)
    nc = pl.num_programs(1)

    @pl.when(c == 0)
    def _():
        m_ref[...] = jnp.full(m_ref.shape, -jnp.inf, dtype=jnp.float32)
        l_ref[...] = jnp.zeros(l_ref.shape, dtype=jnp.float32)
        pk_ref[...] = jnp.zeros(pk_ref.shape, dtype=jnp.float32)

    x = pred_ref[...].astype(jnp.float32)                         # (TR, TC)
    cls = c * c_block + jax.lax.broadcasted_iota(jnp.int32, x.shape, 1)
    if num_classes % c_block != 0:
        # partial last class block: mask out-of-range (undefined) columns
        x = jnp.where(cls < num_classes, x, -jnp.inf)

    tgt = tgt_ref[...]                                            # (TR, 1) int32

    # online log-sum-exp over class tiles
    m_prev = m_ref[...]
    m_new = jnp.maximum(m_prev, jnp.max(x, axis=-1, keepdims=True))
    alpha = jnp.exp(m_prev - m_new)                               # 0 on first block
    l_ref[...] = l_ref[...] * alpha + jnp.sum(jnp.exp(x - m_new),
                                              axis=-1, keepdims=True)
    m_ref[...] = m_new

    # running picked logit x[tgt] (exactly one class block can hit per row;
    # sentinel / padded rows never hit, so the select discards any garbage)
    hit = cls == tgt
    pk_ref[...] += jnp.sum(jnp.where(hit, x, 0.0), axis=-1, keepdims=True)

    @pl.when(c == nc - 1)
    def _():
        lse = m_ref[...] + jnp.log(l_ref[...])                    # (TR, 1)
        # per-row NLL = lse - x[tgt]; select (not multiply) so NaN/Inf from
        # undefined padding rows is dropped, not propagated.
        loss = jnp.where(tgt >= 0, lse - pk_ref[...], 0.0)
        out_ref[...] = jnp.broadcast_to(jnp.sum(loss), out_ref.shape)


def masked_cross_entropy_loss(prediction, target, length, *,
                              sequence_normalize=False, sample_normalize=True,
                              row_block=None, class_block=None):
    assert not (sequence_normalize and sample_normalize)
    B, T, C = prediction.shape
    N = B * T

    # mask[b, t] = 1 for t < length[b] (same as the PyTorch fill_ loop), folded
    # into the target as a -1 sentinel -> masked rows contribute exactly 0 loss.
    mask = jnp.arange(T, dtype=jnp.int32)[None, :] < length.astype(jnp.int32)[:, None]
    tgt_masked = jnp.where(mask, target.astype(jnp.int32), jnp.int32(-1))

    pred2 = prediction.reshape(N, C)            # stays in its HBM dtype (bf16 ok)
    bytes_per = int(jnp.dtype(prediction.dtype).itemsize)
    sub = max(8, 32 // bytes_per)               # sublane pack: 8 f32, 16 bf16, 32 int8

    # ---- class tile: full C when small (or forced), else 2048-wide lane-dense ----
    if class_block is None:
        cls_cap = 2048                          # multiple of 128
        TC = C if C <= cls_cap else cls_cap
    else:
        TC = int(class_block)
        assert TC == C or TC % 128 == 0
    nc = int(pl.cdiv(C, TC))

    # ---- row tile: VMEM budget counts double-buffered pred tile (HBM dtype),
    # ~3 f32 temporaries per element, and the (TR,1) scratch / target rows. ----
    limit = _vmem_limit_bytes()
    budget = int(limit * 0.6)
    per_row = TC * (2 * bytes_per + 12) + 2560
    if row_block is not None:
        TR = int(row_block)
        assert TR == N or TR % sub == 0
    elif N <= sub:
        TR = N
    else:
        TR = min(1024, max(sub, budget // per_row), N)
        TR = max(sub, (TR // sub) * sub)

    num_blocks = int(pl.cdiv(N, TR))

    # pad targets (cheap) to a whole number of row blocks with the -1 sentinel so
    # tail blocks need no in-kernel row masking.
    n_pad = num_blocks * TR
    tgt2 = tgt_masked.reshape(N, 1)
    if n_pad > N:
        tgt2 = jnp.concatenate(
            [tgt2, jnp.full((n_pad - N, 1), -1, dtype=jnp.int32)], axis=0)

    kernel = functools.partial(_mce_kernel, c_block=TC, num_classes=C)

    partials = pl.pallas_call(
        kernel,
        out_shape=jax.ShapeDtypeStruct((num_blocks, 8, 128), jnp.float32),
        grid_spec=pltpu.PrefetchScalarGridSpec(
            num_scalar_prefetch=0,
            grid=(num_blocks, nc),
            in_specs=[
                pl.BlockSpec((TR, TC), lambda i, c: (i, c)),
                pl.BlockSpec((TR, 1), lambda i, c: (i, 0)),   # held across c
            ],
            out_specs=pl.BlockSpec((1, 8, 128), lambda i, c: (i, 0, 0)),
            scratch_shapes=[pltpu.VMEM((TR, 1), jnp.float32)] * 3,
        ),
        compiler_params=pltpu.CompilerParams(
            dimension_semantics=("parallel", "arbitrary"),
            vmem_limit_bytes=limit,
        ),
    )(pred2, tgt2)

    loss = jnp.sum(partials[:, 0, 0])
    if sequence_normalize:
        loss = loss / jnp.sum(mask.astype(jnp.float32))
    if sample_normalize:
        loss = loss / B
    return loss


def _reference(prediction, target, length):
    B, T, _ = prediction.shape
    logp = jax.nn.log_softmax(prediction.astype(jnp.float32), axis=-1)
    picked = jnp.take_along_axis(logp, target[..., None].astype(jnp.int32),
                                 axis=-1)[..., 0]
    m = (jnp.arange(T)[None, :] < length[:, None]).astype(jnp.float32)
    return jnp.sum(-picked * m) / B


if __name__ == "__main__":
    key = jax.random.PRNGKey(0)
    k1, k2, k3, k4 = jax.random.split(key, 4)

    # Test 1: module-shaped small example (single row block, single class block).
    B, T, C = 2, 8, 32
    prediction = jax.random.normal(k1, (B, T, C), dtype=jnp.float32)
    target = jax.random.randint(k2, (B, T), 0, C, dtype=jnp.int32)
    length = jnp.array([8, 5], dtype=jnp.int32)          # max(length) == T
    out = jax.block_until_ready(masked_cross_entropy_loss(prediction, target, length))
    ref = _reference(prediction, target, length)
    np.testing.assert_allclose(np.asarray(out), np.asarray(ref), rtol=1e-5, atol=1e-5)

    # Test 2: force the tiled paths — 3 row blocks with padded tail rows (N=21,
    # TR=8) and 2 class blocks with a partial last block (C=192, TC=128), so the
    # online-LSE, class-mask, and sentinel-padding code paths are all exercised.
    B2, T2, C2 = 3, 7, 192
    prediction2 = jax.random.normal(k3, (B2, T2, C2), dtype=jnp.float32)
    target2 = jax.random.randint(k4, (B2, T2), 0, C2, dtype=jnp.int32)
    length2 = jnp.array([7, 5, 3], dtype=jnp.int32)
    out2 = jax.block_until_ready(
        masked_cross_entropy_loss(prediction2, target2, length2,
                                  row_block=8, class_block=128))
    ref2 = _reference(prediction2, target2, length2)
    np.testing.assert_allclose(np.asarray(out2), np.asarray(ref2), rtol=1e-5, atol=1e-5)

    print("KERNEL_OK")
</pallas_src>

<mosaic_0001>
module attributes {stable_mosaic.version = 11 : i64} {
  func.func @_mce_kernel(%arg0: i32, %arg1: i32, %arg2: memref<16x32xf32, #tpu.memory_space<vmem>>, %arg3: memref<16x1xi32, #tpu.memory_space<vmem>>, %arg4: memref<1x8x128xf32, #tpu.memory_space<vmem>>, %arg5: memref<16x1xf32, #tpu.memory_space<vmem>>, %arg6: memref<16x1xf32, #tpu.memory_space<vmem>>, %arg7: memref<16x1xf32, #tpu.memory_space<vmem>>) attributes {dimension_semantics = [#tpu.dimension_semantics<parallel>, #tpu.dimension_semantics<arbitrary>], iteration_bounds = array<i64: 1, 1>, scalar_prefetch = 0 : i64, scratch_operands = 3 : i64, tpu.core_type = #tpu.core_type<tc>, window_params = [{transform_indices = @transform_0, window_bounds = array<i64: 16, 32>}, {transform_indices = @transform_1, window_bounds = array<i64: 16, 1>}, {transform_indices = @transform_2, window_bounds = array<i64: 1, 8, 128>}]} {
    %c0_i32 = arith.constant 0 : i32
    %0 = arith.cmpi eq, %arg1, %c0_i32 : i32
    %1 = arith.extui %0 : i1 to i32
    %c0_i32_0 = arith.constant 0 : i32
    %2 = arith.cmpi ne, %1, %c0_i32_0 : i32
    scf.if %2 {
      %cst_21 = arith.constant 0xFF800000 : f32
      %37 = vector.broadcast %cst_21 : f32 to vector<16x1xf32>
      %c0_22 = arith.constant 0 : index
      %c0_23 = arith.constant 0 : index
      %38 = vector.load %arg5[%c0_22, %c0_23] : memref<16x1xf32, #tpu.memory_space<vmem>>, vector<16x1xf32>
      tpu.vector_store %arg5[%c0_22, %c0_23], %37 {strides = array<i32>} : memref<16x1xf32, #tpu.memory_space<vmem>>, vector<16x1xf32>,
      %cst_24 = arith.constant 0.000000e+00 : f32
      %39 = vector.broadcast %cst_24 : f32 to vector<16x1xf32>
      %c0_25 = arith.constant 0 : index
      %c0_26 = arith.constant 0 : index
      %40 = vector.load %arg6[%c0_25, %c0_26] : memref<16x1xf32, #tpu.memory_space<vmem>>, vector<16x1xf32>
      tpu.vector_store %arg6[%c0_25, %c0_26], %39 {strides = array<i32>} : memref<16x1xf32, #tpu.memory_space<vmem>>, vector<16x1xf32>,
      %cst_27 = arith.constant 0.000000e+00 : f32
      %41 = vector.broadcast %cst_27 : f32 to vector<16x1xf32>
      %c0_28 = arith.constant 0 : index
      %c0_29 = arith.constant 0 : index
      %42 = vector.load %arg7[%c0_28, %c0_29] : memref<16x1xf32, #tpu.memory_space<vmem>>, vector<16x1xf32>
      tpu.vector_store %arg7[%c0_28, %c0_29], %41 {strides = array<i32>} : memref<16x1xf32, #tpu.memory_space<vmem>>, vector<16x1xf32>,
    } else {
    }
    %c0 = arith.constant 0 : index
    %c0_1 = arith.constant 0 : index
    %3 = vector.load %arg2[%c0, %c0_1] : memref<16x32xf32, #tpu.memory_space<vmem>>, vector<16x32xf32>
    %c32_i32 = arith.constant 32 : i32
    %4 = arith.muli %arg1, %c32_i32 : i32
    %5 = tpu.iota {dimensions = array<i32: 1>} : vector<16x32xi32>
    %6 = vector.broadcast %4 : i32 to vector<16x32xi32>
    %7 = arith.addi %6, %5 : vector<16x32xi32>
    %c0_2 = arith.constant 0 : index
    %c0_3 = arith.constant 0 : index
    %8 = vector.load %arg3[%c0_2, %c0_3] : memref<16x1xi32, #tpu.memory_space<vmem>>, vector<16x1xi32>
    %c0_4 = arith.constant 0 : index
    %c0_5 = arith.constant 0 : index
    %9 = vector.load %arg5[%c0_4, %c0_5] : memref<16x1xf32, #tpu.memory_space<vmem>>, vector<16x1xf32>
    %cst = arith.constant dense<0xFF800000> : vector<16xf32>
    %10 = vector.multi_reduction <maximumf>, %3, %cst [1] : vector<16x32xf32> to vector<16xf32>
    %11 = vector.shape_cast %10 : vector<16xf32> to vector<16x1xf32>
    %12 = arith.maximumf %9, %11 : vector<16x1xf32>
    %13 = arith.subf %9, %12 : vector<16x1xf32>
    %14 = math.exp %13 : vector<16x1xf32>
    %c0_6 = arith.constant 0 : index
    %c0_7 = arith.constant 0 : index
    %15 = vector.load %arg6[%c0_6, %c0_7] : memref<16x1xf32, #tpu.memory_space<vmem>>, vector<16x1xf32>
    %16 = arith.mulf %15, %14 : vector<16x1xf32>
    %17 = vector.broadcast %12 : vector<16x1xf32> to vector<16x32xf32>
    %18 = arith.subf %3, %17 : vector<16x32xf32>
    %19 = math.exp %18 : vector<16x32xf32>
    %cst_8 = arith.constant dense<0.000000e+00> : vector<16xf32>
    %20 = vector.multi_reduction <add>, %19, %cst_8 [1] : vector<16x32xf32> to vector<16xf32>
    %21 = vector.shape_cast %20 : vector<16xf32> to vector<16x1xf32>
    %22 = arith.addf %16, %21 : vector<16x1xf32>
    %c0_9 = arith.constant 0 : index
    %c0_10 = arith.constant 0 : index
    %23 = vector.load %arg6[%c0_9, %c0_10] : memref<16x1xf32, #tpu.memory_space<vmem>>, vector<16x1xf32>
    tpu.vector_store %arg6[%c0_9, %c0_10], %22 {strides = array<i32>} : memref<16x1xf32, #tpu.memory_space<vmem>>, vector<16x1xf32>,
    %c0_11 = arith.constant 0 : index
    %c0_12 = arith.constant 0 : index
    %24 = vector.load %arg5[%c0_11, %c0_12] : memref<16x1xf32, #tpu.memory_space<vmem>>, vector<16x1xf32>
    tpu.vector_store %arg5[%c0_11, %c0_12], %12 {strides = array<i32>} : memref<16x1xf32, #tpu.memory_space<vmem>>, vector<16x1xf32>,
    %25 = vector.broadcast %8 : vector<16x1xi32> to vector<16x32xi32>
    %26 = arith.cmpi eq, %7, %25 : vector<16x32xi32>
    %c0_13 = arith.constant 0 : index
    %c0_14 = arith.constant 0 : index
    %27 = vector.load %arg7[%c0_13, %c0_14] : memref<16x1xf32, #tpu.memory_space<vmem>>, vector<16x1xf32>
    %cst_15 = arith.constant 0.000000e+00 : f32
    %28 = vector.broadcast %cst_15 : f32 to vector<16x32xf32>
    %29 = arith.select %26, %3, %28 : vector<16x32xi1>, vector<16x32xf32>
    %cst_16 = arith.constant dense<0.000000e+00> : vector<16xf32>
    %30 = vector.multi_reduction <add>, %29, %cst_16 [1] : vector<16x32xf32> to vector<16xf32>
    %31 = vector.shape_cast %30 : vector<16xf32> to vector<16x1xf32>
    %32 = arith.addf %27, %31 : vector<16x1xf32>
    %c0_17 = arith.constant 0 : index
    %c0_18 = arith.constant 0 : index
    %33 = vector.load %arg7[%c0_17, %c0_18] : memref<16x1xf32, #tpu.memory_space<vmem>>, vector<16x1xf32>
    tpu.vector_store %arg7[%c0_17, %c0_18], %32 {strides = array<i32>} : memref<16x1xf32, #tpu.memory_space<vmem>>, vector<16x1xf32>,
    %c0_i32_19 = arith.constant 0 : i32
    %34 = arith.cmpi eq, %arg1, %c0_i32_19 : i32
    %35 = arith.extui %34 : i1 to i32
    %c0_i32_20 = arith.constant 0 : i32
    %36 = arith.cmpi ne, %35, %c0_i32_20 : i32
    scf.if %36 {
      %c0_21 = arith.constant 0 : index
      %c0_22 = arith.constant 0 : index
      %37 = vector.load %arg5[%c0_21, %c0_22] : memref<16x1xf32, #tpu.memory_space<vmem>>, vector<16x1xf32>
      %c0_23 = arith.constant 0 : index
      %c0_24 = arith.constant 0 : index
      %38 = vector.load %arg6[%c0_23, %c0_24] : memref<16x1xf32, #tpu.memory_space<vmem>>, vector<16x1xf32>
      %39 = math.log %38 : vector<16x1xf32>
      %40 = arith.addf %37, %39 : vector<16x1xf32>
      %c0_i32_25 = arith.constant 0 : i32
      %41 = vector.broadcast %c0_i32_25 : i32 to vector<16x1xi32>
      %42 = arith.cmpi sge, %8, %41 : vector<16x1xi32>
      %c0_26 = arith.constant 0 : index
      %c0_27 = arith.constant 0 : index
      %43 = vector.load %arg7[%c0_26, %c0_27] : memref<16x1xf32, #tpu.memory_space<vmem>>, vector<16x1xf32>
      %44 = arith.subf %40, %43 : vector<16x1xf32>
      %cst_28 = arith.constant 0.000000e+00 : f32
      %45 = vector.broadcast %cst_28 : f32 to vector<16x1xf32>
      %46 = arith.select %42, %44, %45 : vector<16x1xi1>, vector<16x1xf32>
      %47 = vector.shape_cast %46 : vector<16x1xf32> to vector<1x16x1xf32>
      %cst_29 = arith.constant dense<0.000000e+00> : vector<1xf32>
      %48 = vector.multi_reduction <add>, %47, %cst_29 [1, 2] : vector<1x16x1xf32> to vector<1xf32>
      %49 = vector.shape_cast %48 : vector<1xf32> to vector<1x1x1xf32>
      %50 = vector.extract %49[0, 0, 0] : f32 from vector<1x1x1xf32>
      %51 = vector.broadcast %50 : f32 to vector<1x8x128xf32>
      %c0_30 = arith.constant 0 : index
      %c0_31 = arith.constant 0 : index
      %c0_32 = arith.constant 0 : index
      %52 = vector.load %arg4[%c0_30, %c0_31, %c0_32] : memref<1x8x128xf32, #tpu.memory_space<vmem>>, vector<1x8x128xf32>
      tpu.vector_store %arg4[%c0_30, %c0_31, %c0_32], %51 {strides = array<i32>} : memref<1x8x128xf32, #tpu.memory_space<vmem>>, vector<1x8x128xf32>,
    } else {
    }
    return
  }
  func.func @transform_0(%arg0: i32, %arg1: i32) -> (i32, i32) {
    %c0_i32 = arith.constant 0 : i32
    return %arg0, %arg1 : i32, i32
  }
  func.func @transform_1(%arg0: i32, %arg1: i32) -> (i32, i32) {
    %c0_i32 = arith.constant 0 : i32
    %c0_i32_0 = arith.constant 0 : i32
    return %arg0, %c0_i32 : i32, i32
  }
  func.func @transform_2(%arg0: i32, %arg1: i32) -> (i32, i32, i32) {
    %c0_i32 = arith.constant 0 : i32
    %c0_i32_0 = arith.constant 0 : i32
    %c0_i32_1 = arith.constant 0 : i32
    return %arg0, %c0_i32, %c0_i32_0 : i32, i32, i32
  }
}

</mosaic_0001>

<llo_original>
// kernel: tpu_custom_call.1
$region0: #{tpu_custom_call.1}
  #allocation0 [shape = 'u32[]', space=smem, size = 0x4, offset = 0x4, fixed_abs, tag = 'smem constant byte address 0x4 - core index']
  #allocation1 [shape = 'u32[144,128]{1,0:T(1,128)}', space=vmem, size = 0x12000, scoped, tag = 'internal scratch']
  #allocation2 [shape = 'f32[16,1]{1,0:T(8,128)}', space=vmem, size = 0x2000, scoped, tag = 'scratch operand']
  #allocation3 [shape = 'f32[16,1]{1,0:T(8,128)}', space=vmem, size = 0x2000, scoped, tag = 'scratch operand']
  #allocation4 [shape = 'f32[16,1]{1,0:T(8,128)}', space=vmem, size = 0x2000, scoped, tag = 'scratch operand']
  %s0 = inlined_call_operand.vmem [shape: f32[16,32], index: 0, kind: input, shape index: {}]
  %s1 = inlined_call_operand.vmem [shape: s32[16,1], index: 1, kind: input, shape index: {}]
  %s2 = inlined_call_operand.hbm [shape: f32[1,8,128], index: 2, kind: output, shape index: {}]
  %s3 = sld [smem:[#allocation0]]
  $region26: #{tpu_custom_call.1} parent=0
    _
  %s5 = ssub.s32 1, %s3
  %s6 = scalar_select 0, %s5, %s3
  $region1: #{tpu_custom_call.1} parent=0
    #allocation5 [shape = 'u8[4096]{0}', space=vmem, size = 0x1000, scoped, tag = 'output window, operand 0, single buffered']
    #allocation6 [shape = 's32[1]{0}', space=sflag, size = 0x4, scoped, tag = 'scoped memory for tpu_custom_call.1']
    %7 = vsyncpa [#allocation6], 0
    // Predicated region
    $region2: #{tpu_custom_call.1} parent=1 // pred_check
      _
    $region3: #{tpu_custom_call.1} parent=1 // pred_check_branch
      %9 = sbr.rel (0) target = $region5
    $region4: #{tpu_custom_call.1} parent=1 // pred_region
      _
    $region5: #{tpu_custom_call.1} parent=1 // pred_fallthru
      _
    // Predicated region
    $region6: #{tpu_custom_call.1} parent=1 // pred_check
      _
    $region7: #{tpu_custom_call.1} parent=1 // pred_check_branch
      %11 = sbr.rel (0) target = $region9
    $region8: #{tpu_custom_call.1} parent=1 // pred_region
      _
    $region9: #{tpu_custom_call.1} parent=1 // pred_fallthru
      _
    %p12 = scmp.eq.s32.totalorder 0, 0
    // Predicated region
    $region10: #{tpu_custom_call.1} parent=1 // pred_check
      %p13 = pneg %p12
    $region11: #{tpu_custom_call.1} parent=1 // pred_check_branch
      %15 = sbr.rel (%p13) target = $region13
    $region12: #{tpu_custom_call.1} parent=1 // pred_region
      %vm16 = vcmask 7168
      %17 = vst.msk [vmem:[#allocation2] sm:$0xff] %vm16, -inf
      %18 = vst.msk [vmem:[#allocation2 + $0x8] sm:$0xff] %vm16, -inf
      %19 = vst.msk [vmem:[#allocation3] sm:$0xff] %vm16, 0.0
      %20 = vst.msk [vmem:[#allocation3 + $0x8] sm:$0xff] %vm16, 0.0
      %21 = vst.msk [vmem:[#allocation4] sm:$0xff] %vm16, 0.0
      %22 = vst.msk [vmem:[#allocation4 + $0x8] sm:$0xff] %vm16, 0.0
    $region13: #{tpu_custom_call.1} parent=1 // pred_fallthru
      _
    %v23 = vld [vmem:[%s0] sm:$0xff]
    %v24 = vld [vmem:[%s0 + $0x8] sm:$0xff]
    %s25 = smul.u32 0, 32
    %v26 = vlaneseq
    %v27 = vand.u32 %v26, 127
    %v28 = vstv %s25
    %v29 = vadd.s32 %v28, %v27
    %v30 = vld [vmem:[%s1] sm:$0xff]
    %v31 = vld [vmem:[%s1 + $0x8] sm:$0xff]
    %v32 = vld [vmem:[#allocation2] sm:$0xff]
    %v33 = vld [vmem:[#allocation2 + $0x8] sm:$0xff]
    %vm34 = vcmask 261120
    %v35 = vsel %vm34, %v23, -inf
    %36 = vmax.xlane.f32.xlu0 %v35
    %v37 = vpop.xlane.xlu0 %36
    %v38 = vsel %vm34, %v24, -inf
    %39 = vmax.xlane.f32.xlu0 %v38
    %v40 = vpop.xlane.xlu0 %39
    %v41 = vmax.f32 %v32, %v37
    %v42 = vmax.f32 %v33, %v40
    %v43 = vsub.f32 %v32, %v41
    %v44 = vsub.f32 %v33, %v42
    %v45 = vmul.f32 %v43, 1.442695
    %v46 = vpow.pop %v45
    %v47 = vmul.f32 %v44, 1.442695
    %v48 = vpow.pop %v47
    %v49 = vld [vmem:[#allocation3] sm:$0xff]
    %v50 = vld [vmem:[#allocation3 + $0x8] sm:$0xff]
    %v51 = vmul.f32 %v49, %v46
    %v52 = vmul.f32 %v50, %v48
    %54 = vset.pattern.permute.xlu0 0
    %55 = vperm.xlu0 %54, %v41
    %v56 = vpop.permute.xlu0 %55
    %59 = vset.pattern.permute.xlu0 0
    %60 = vperm.xlu0 %59, %v42
    %v61 = vpop.permute.xlu0 %60
    %v63 = vsub.f32 %v23, %v56
    %v64 = vsub.f32 %v24, %v61
    %v65 = vmul.f32 %v63, 1.442695
    %v66 = vpow.pop %v65
    %v67 = vmul.f32 %v64, 1.442695
    %v68 = vpow.pop %v67
    %v69 = vsel %vm34, %v66, 0.0
    %70 = vadd.xlane.f32.xlu0 %v69
    %v71 = vpop.xlane.xlu0 %70
    %v72 = vsel %vm34, %v68, 0.0
    %73 = vadd.xlane.f32.xlu0 %v72
    %v74 = vpop.xlane.xlu0 %73
    %v75 = vadd.f32 %v51, %v71
    %v76 = vadd.f32 %v52, %v74
    %vm77 = vcmask 7168
    %78 = vst.msk [vmem:[#allocation3] sm:$0xff] %vm77, %v75
    %79 = vst.msk [vmem:[#allocation3 + $0x8] sm:$0xff] %vm77, %v76
    %80 = vst.msk [vmem:[#allocation2] sm:$0xff] %vm77, %v41
    %81 = vst.msk [vmem:[#allocation2 + $0x8] sm:$0xff] %vm77, %v42
    %82 = vset.pattern.permute.xlu0 0
    %83 = vperm.xlu0 %82, %v30
    %v84 = vpop.permute.xlu0 %83
    %85 = vset.pattern.permute.xlu0 0
    %86 = vperm.xlu0 %85, %v31
    %v87 = vpop.permute.xlu0 %86
    %vm88 = vcmp.eq.s32.totalorder %v29, %v84
    %vm89 = vcmp.eq.s32.totalorder %v29, %v87
    %v90 = vld [vmem:[#allocation4] sm:$0xff]
    %v91 = vld [vmem:[#allocation4 + $0x8] sm:$0xff]
    %v92 = vsel %vm88, %v23, 0.0
    %v93 = vsel %vm89, %v24, 0.0
    %v94 = vsel %vm34, %v92, 0.0
    %95 = vadd.xlane.f32.xlu0 %v94
    %v96 = vpop.xlane.xlu0 %95
    %v97 = vsel %vm34, %v93, 0.0
    %98 = vadd.xlane.f32.xlu0 %v97
    %v99 = vpop.xlane.xlu0 %98
    %v100 = vadd.f32 %v90, %v96
    %v101 = vadd.f32 %v91, %v99
    %102 = vst.msk [vmem:[#allocation4] sm:$0xff] %vm77, %v100
    %103 = vst.msk [vmem:[#allocation4 + $0x8] sm:$0xff] %vm77, %v101
    // Predicated region
    $region14: #{tpu_custom_call.1} parent=1 // pred_check
      %p104 = pneg %p12
    $region15: #{tpu_custom_call.1} parent=1 // pred_check_branch
      %106 = sbr.rel (%p104) target = $region17
    $region16: #{tpu_custom_call.1} parent=1 // pred_region
      %v107 = vld [vmem:[#allocation2] sm:$0xff]
      %v108 = vld [vmem:[#allocation2 + $0x8] sm:$0xff]
      %v109 = vld [vmem:[#allocation3] sm:$0xff]
      %v110 = vld [vmem:[#allocation3 + $0x8] sm:$0xff]
      %v111 = vlog2.pop %v109
      %v112 = vmul.f32 %v111, 0.6931472
      %v113 = vlog2.pop %v110
      %v114 = vmul.f32 %v113, 0.6931472
      %v115 = vadd.f32 %v107, %v112
      %v116 = vadd.f32 %v108, %v114
      %vm117 = vcmp.ge.s32.totalorder %v30, 0
      %vm118 = vcmp.ge.s32.totalorder %v31, 0
      %v119 = vld [vmem:[#allocation4] sm:$0xff]
      %v120 = vld [vmem:[#allocation4 + $0x8] sm:$0xff]
      %v121 = vsub.f32 %v115, %v119
      %v122 = vsub.f32 %v116, %v120
      %v123 = vsel %vm117, %v121, 0.0
      %v124 = vsel %vm118, %v122, 0.0
      %v125 = vsel %vm77, %v123, 0.0
      %v126 = vsel %vm77, %v124, 0.0
      %v127 = vadd.f32 %v125, %v126
      %128 = vadd.xlane.f32.xlu0 %v127
      %v129 = vpop.xlane.xlu0 %128
      %v130 = vrot.slane %v129, 4
      %v131 = vadd.f32 %v129, %v130
      %v132 = vrot.slane %v131, 2
      %v133 = vadd.f32 %v131, %v132
      %v134 = vrot.slane %v133, 1
      %v135 = vadd.f32 %v133, %v134
      %s136 = vtos %v135
      %v137 = vstv %s136
      %138 = vst [vmem:[#allocation5] sm:$0xff] %v137
    $region17: #{tpu_custom_call.1} parent=1 // pred_fallthru
      _
    // Predicated region
    $region18: #{tpu_custom_call.1} parent=1 // pred_check
      _
    $region19: #{tpu_custom_call.1} parent=1 // pred_check_branch
      %140 = sbr.rel (0) target = $region21
    $region20: #{tpu_custom_call.1} parent=1 // pred_region
      %s142 = ssub.s32 128, 128
      %143 = vsyncadd [#allocation6], %s142
      %s145 = sshll.u32 [#allocation5], 4
      %s146 = int_to_ptr.vmem [resolvable:$true] %s145
      %148 = dma.vmem_to_hbm [thread:$0]  %s146, 128, %s2, [#allocation6]
    $region21: #{tpu_custom_call.1} parent=1 // pred_fallthru
      _
    // Predicated region
    $region22: #{tpu_custom_call.1} parent=1 // pred_check
      _
    $region23: #{tpu_custom_call.1} parent=1 // pred_check_branch
      %150 = sbr.rel (0) target = $region25
    $region24: #{tpu_custom_call.1} parent=1 // pred_region
      %151 = dma.done [#allocation6], 128
    $region25: #{tpu_custom_call.1} parent=1 // pred_fallthru
      _
    %152 = vsyncpa [#allocation6], 1

</llo_original>
